<compile_context>
chip_gen: v5e
topology: v5e:2x2
jax: 0.10.0
libtpu: 0.0.40
codegen_flags: <defaults>
</compile_context>

<pallas_src>
import functools

import jax
import jax.numpy as jnp
from jax.experimental import pallas as pl
from jax.experimental.pallas import tpu as pltpu

_LANE_CHOICES = (512, 256, 128)   # last dim of the slab; multiples of 128
_MIN_LANES = 128


def _sublane_granule(dtype) -> int:
    # f32 -> 8, bf16/f16 -> 16, int8/fp8 -> 32 (packed sublanes).
    return max(8, 32 // jnp.dtype(dtype).itemsize)


def _expression_kernel(func, compute_dtype, x_ref, o_ref):
    # Elementwise hot path: load the VMEM tile, apply the wrapped expression,
    # store in the output dtype.  Transcendentals inside `func` (exp, sigmoid)
    # land on the EUP slot; the kernel stays memory-bound.
    x = x_ref[...]
    if compute_dtype is not None:
        x = x.astype(compute_dtype)
    o_ref[...] = func(x).astype(o_ref.dtype)


def make_expression(func, *, min_pallas_elems: int = 0,
                    tile_bytes: int = 2 * 1024 * 1024):
    """Returns a callable reproducing Expression(func).forward semantics.

    `func` must be elementwise for the Pallas path; non-elementwise funcs
    (shape-changing) fall back to plain JAX.
    """

    def apply(x):
        # --- trace func once to learn output shape/dtype ---------------------
        out_aval = jax.eval_shape(func, jax.ShapeDtypeStruct(x.shape, x.dtype))
        if out_aval.shape != x.shape:
            # TODO(synk): non-elementwise wrapped funcs (reductions, pooling)
            # have no generic flattened-slab kernel; fall back to plain JAX.
            return func(x)
        out_dtype = out_aval.dtype

        n = x.size
        if n == 0 or n < min_pallas_elems:
            # Tiny activations: let XLA fuse the expression into neighbors
            # instead of paying a standalone kernel launch.
            return func(x)

        in_dtype = x.dtype
        compute_dtype = (jnp.float32
                         if jnp.dtype(in_dtype).itemsize == 2 else None)

        # --- choose a lane-dense slab layout (no padding when divisible) -----
        lanes = next((w for w in _LANE_CHOICES if n % w == 0), None)
        if lanes is None:
            lanes = _MIN_LANES
            padded_n = pl.cdiv(n, lanes) * lanes
        else:
            padded_n = n
        pad = padded_n - n

        flat = x.reshape(-1)
        if pad:
            flat = jnp.pad(flat, (0, pad))     # fallback path only
        rows = padded_n // lanes
        slab = flat.reshape(rows, lanes)

        # --- row tiling: ~tile_bytes per block, sublane-aligned --------------
        sub = max(_sublane_granule(in_dtype), _sublane_granule(out_dtype))
        row_bytes = lanes * max(jnp.dtype(in_dtype).itemsize,
                                jnp.dtype(out_dtype).itemsize)
        target_rows = max(sub, (tile_bytes // row_bytes) // sub * sub)
        if rows <= target_rows:
            tile_r = rows                      # single full block
        else:
            tile_r = target_rows               # multiple of `sub`
        grid = (pl.cdiv(rows, tile_r),)

        out_slab = pl.pallas_call(
            functools.partial(_expression_kernel, func, compute_dtype),
            out_shape=jax.ShapeDtypeStruct((rows, lanes), out_dtype),
            grid=grid,
            in_specs=[pl.BlockSpec((tile_r, lanes), lambda i: (i, 0))],
            out_specs=pl.BlockSpec((tile_r, lanes), lambda i: (i, 0)),
            compiler_params=pltpu.CompilerParams(
                dimension_semantics=("parallel",)),
        )(slab)

        # --- restore the original NCHW shape ----------------------------------
        out_flat = out_slab.reshape(-1)
        if pad:
            out_flat = out_flat[:n]
        return out_flat.reshape(x.shape)

    return apply


if __name__ == "__main__":
    # Example wrapped expression (deterministic, elementwise): u * sigmoid(u)
    func = lambda u: u * jax.nn.sigmoid(u)
    expression = make_expression(func)

    key = jax.random.PRNGKey(0)

    # 1) MNIST-like activation (NCHW), 2048 elems -> 512-lane slab, no padding.
    x = jax.random.normal(key, (2, 4, 16, 16), dtype=jnp.float32)
    out = jax.block_until_ready(expression(x))
    ref = func(x)
    assert out.shape == x.shape and out.dtype == ref.dtype
    assert jnp.allclose(out, ref, atol=1e-6, rtol=1e-6)

    # 2) Larger activation with a small tile budget -> multi-block pipelined grid.
    expression_tiled = make_expression(func, tile_bytes=16 * 1024)
    x2 = jax.random.normal(jax.random.PRNGKey(1), (4, 8, 32, 32),
                           dtype=jnp.float32)
    out2 = jax.block_until_ready(expression_tiled(x2))
    assert jnp.allclose(out2, func(x2), atol=1e-6, rtol=1e-6)

    # 3) Ragged size (not 128-divisible) -> zero-pad fallback path.
    x3 = jax.random.normal(jax.random.PRNGKey(2), (2, 3, 17, 19),
                           dtype=jnp.float32)
    out3 = jax.block_until_ready(expression(x3))
    assert jnp.allclose(out3, func(x3), atol=1e-6, rtol=1e-6)

    print("KERNEL_OK")
</pallas_src>

<mosaic_0001>
module attributes {stable_mosaic.version = 11 : i64} {
  func.func @_expression_kernel(%arg0: i32, %arg1: memref<4x512xf32, #tpu.memory_space<vmem>>, %arg2: memref<4x512xf32, #tpu.memory_space<vmem>>) attributes {dimension_semantics = [#tpu.dimension_semantics<parallel>], iteration_bounds = array<i64: 1>, scalar_prefetch = 0 : i64, scratch_operands = 0 : i64, tpu.core_type = #tpu.core_type<tc>, window_params = [{transform_indices = @transform_0, window_bounds = array<i64: 4, 512>}, {transform_indices = @transform_1, window_bounds = array<i64: 4, 512>}]} {
    %c0 = arith.constant 0 : index
    %c0_0 = arith.constant 0 : index
    %0 = vector.load %arg1[%c0, %c0_0] : memref<4x512xf32, #tpu.memory_space<vmem>>, vector<4x512xf32>
    %1 = arith.negf %0 : vector<4x512xf32>
    %2 = math.exp %1 : vector<4x512xf32>
    %cst = arith.constant 1.000000e+00 : f32
    %3 = vector.broadcast %cst : f32 to vector<4x512xf32>
    %4 = arith.addf %3, %2 : vector<4x512xf32>
    %5 = arith.divf %3, %4 : vector<4x512xf32>
    %6 = arith.mulf %0, %5 : vector<4x512xf32>
    %c0_1 = arith.constant 0 : index
    %c0_2 = arith.constant 0 : index
    %7 = vector.load %arg2[%c0_1, %c0_2] : memref<4x512xf32, #tpu.memory_space<vmem>>, vector<4x512xf32>
    tpu.vector_store %arg2[%c0_1, %c0_2], %6 {strides = array<i32>} : memref<4x512xf32, #tpu.memory_space<vmem>>, vector<4x512xf32>,
    return
  }
  func.func @transform_0(%arg0: i32) -> (i32, i32) {
    %c0_i32 = arith.constant 0 : i32
    %c0_i32_0 = arith.constant 0 : i32
    return %arg0, %c0_i32 : i32, i32
  }
  func.func @transform_1(%arg0: i32) -> (i32, i32) {
    %c0_i32 = arith.constant 0 : i32
    %c0_i32_0 = arith.constant 0 : i32
    return %arg0, %c0_i32 : i32, i32
  }
}

</mosaic_0001>

<llo_original>
// kernel: tpu_custom_call.1
$region0: #{tpu_custom_call.1}
  #allocation0 [shape = 'u32[]', space=smem, size = 0x4, offset = 0x4, fixed_abs, tag = 'smem constant byte address 0x4 - core index']
  #allocation1 [shape = 'u32[72,128]{1,0:T(1,128)}', space=vmem, size = 0x9000, scoped, tag = 'internal scratch']
  %s0 = inlined_call_operand.hbm [shape: f32[4,512], index: 0, kind: input, shape index: {}]
  %s1 = inlined_call_operand.hbm [shape: f32[4,512], index: 1, kind: output, shape index: {}]
  %s2 = sld [smem:[#allocation0]]
  $region18: #{tpu_custom_call.1} parent=0
    _
  %s4 = ssub.s32 1, %s2
  %s5 = scalar_select 0, %s4, %s2
  $region1: #{tpu_custom_call.1} parent=0
    #allocation2 [shape = 'u8[8192]{0}', space=vmem, size = 0x2000, scoped, tag = 'input window, operand 0, single buffered']
    #allocation3 [shape = 's32[1]{0}', space=sflag, size = 0x4, scoped, tag = 'scoped memory for tpu_custom_call.1']
    #allocation4 [shape = 's32[1]{0}', space=sflag, size = 0x4, scoped, tag = 'scoped memory for tpu_custom_call.1']
    #allocation5 [shape = 'u8[8192]{0}', space=vmem, size = 0x2000, scoped, tag = 'output window, operand 0, single buffered']
    %6 = vsyncpa [#allocation3], 0
    %7 = vsyncpa [#allocation4], 0
    // Predicated region
    $region2: #{tpu_custom_call.1} parent=1 // pred_check
      _
    $region3: #{tpu_custom_call.1} parent=1 // pred_check_branch
      %9 = sbr.rel (0) target = $region5
    $region4: #{tpu_custom_call.1} parent=1 // pred_region
      %11 = vsyncadd [#allocation3], 0
      %s13 = sshll.u32 %s0, 4
      %s14 = int_to_ptr.hbm [resolvable:$true] %s13
      %s15 = sshll.u32 [#allocation2], 4
      %s16 = int_to_ptr.vmem [resolvable:$true] %s15
      %18 = dma.hbm_to_vmem [thread:$0]  %s14, 256, %s16, [#allocation3]
    $region5: #{tpu_custom_call.1} parent=1 // pred_fallthru
      _
    // Predicated region
    $region6: #{tpu_custom_call.1} parent=1 // pred_check
      _
    $region7: #{tpu_custom_call.1} parent=1 // pred_check_branch
      %20 = sbr.rel (0) target = $region9
    $region8: #{tpu_custom_call.1} parent=1 // pred_region
      %22 = dma.done [#allocation3], 256
    $region9: #{tpu_custom_call.1} parent=1 // pred_fallthru
      _
    %v23 = vld [vmem:[#allocation2] sm:$0xff]
    %v24 = vld [vmem:[#allocation2 + $0x8] sm:$0xff]
    %v25 = vxor.u32 %v23, 2147483648
    %v26 = vxor.u32 %v24, 2147483648
    %v27 = vmul.f32 %v25, 1.442695
    %v28 = vpow.pop %v27
    %v29 = vmul.f32 %v26, 1.442695
    %v30 = vpow.pop %v29
    %v31 = vadd.f32 %v28, 1.0
    %v32 = vadd.f32 %v30, 1.0
    %v33 = vrcp.pop %v31
    %v34 = vmul.f32 %v31, %v33
    %v35 = vsub.f32 1.0, %v34
    %v36 = vmul.f32 %v33, %v35
    %v37 = vadd.f32 %v33, %v36
    %vm38 = vweird.f32 %v31
    %vm39 = vweird.f32 %v33
    %vm40 = vmor %vm38, %vm39
    %v41 = vsel %vm40, %v33, %v37
    %v42 = vand.u32 2147483647, %v31
    %vm43 = vcmp.eq.f32.partialorder %v42, 8.507059e+37
    %v44 = vand.u32 %v31, 2147483648
    %v45 = vor.u32 1.1754944e-38, %v44
    %v46 = vsel %vm43, %v45, %v41
    %v47 = vmul.f32 1.0, %v46
    %v48 = vrcp.pop %v32
    %v49 = vmul.f32 %v32, %v48
    %v50 = vsub.f32 1.0, %v49
    %v51 = vmul.f32 %v48, %v50
    %v52 = vadd.f32 %v48, %v51
    %vm53 = vweird.f32 %v32
    %vm54 = vweird.f32 %v48
    %vm55 = vmor %vm53, %vm54
    %v56 = vsel %vm55, %v48, %v52
    %v57 = vand.u32 2147483647, %v32
    %vm58 = vcmp.eq.f32.partialorder %v57, 8.507059e+37
    %v59 = vand.u32 %v32, 2147483648
    %v60 = vor.u32 1.1754944e-38, %v59
    %v61 = vsel %vm58, %v60, %v56
    %v62 = vmul.f32 1.0, %v61
    %v63 = vmul.f32 %v23, %v47
    %v64 = vmul.f32 %v24, %v62
    %65 = vst [vmem:[#allocation5] sm:$0xff] %v63
    %66 = vst [vmem:[#allocation5 + $0x8] sm:$0xff] %v64
    // Predicated region
    $region10: #{tpu_custom_call.1} parent=1 // pred_check
      _
    $region11: #{tpu_custom_call.1} parent=1 // pred_check_branch
      %68 = sbr.rel (0) target = $region13
    $region12: #{tpu_custom_call.1} parent=1 // pred_region
      %70 = vsyncadd [#allocation4], 0
      %s72 = sshll.u32 [#allocation5], 4
      %s73 = int_to_ptr.vmem [resolvable:$true] %s72
      %s74 = sshll.u32 %s1, 4
      %s75 = int_to_ptr.hbm [resolvable:$true] %s74
      %77 = dma.vmem_to_hbm [thread:$0]  %s73, 256, %s75, [#allocation4]
    $region13: #{tpu_custom_call.1} parent=1 // pred_fallthru
      _
    // Predicated region
    $region14: #{tpu_custom_call.1} parent=1 // pred_check
      _
    $region15: #{tpu_custom_call.1} parent=1 // pred_check_branch
      %79 = sbr.rel (0) target = $region17
    $region16: #{tpu_custom_call.1} parent=1 // pred_region
      %81 = dma.done [#allocation4], 256
    $region17: #{tpu_custom_call.1} parent=1 // pred_fallthru
      _
    %82 = vsyncpa [#allocation3], 1
    %83 = vsyncpa [#allocation4], 1

</llo_original>
